<compile_context>
chip_gen: v6e
topology: v6e:2x2x1
jax: 0.10.0
libtpu: 0.0.40
codegen_flags: <defaults>
</compile_context>

<pallas_src>
import functools

import jax
import jax.numpy as jnp
from jax.experimental import pallas as pl
from jax.experimental.pallas import tpu as pltpu


# ---------------------------------------------------------------------------
# Phase 1: pooled statistics (avg + max over HW), tiled over the spatial axis.
# ---------------------------------------------------------------------------
def _pool_kernel(x1_ref, x2_ref, y_ref, s1, s2, m1, m2, *, dim, inv_hw):
    """Accumulate per-channel sum/max of x1 and x2 over HW tiles.

    No concat is materialized: pooling cat(x1, x2) along channels is equivalent
    to pooling x1 and x2 separately and stacking the results.
    On the last HW tile, writes y = [avg(x1), avg(x2), max(x1), max(x2)] as a
    (4C, 1) column for the current batch.
    """
    C = dim
    t = pl.program_id(1)

    @pl.when(t == 0)
    def _init():
        s1[...] = jnp.zeros_like(s1)
        s2[...] = jnp.zeros_like(s2)
        m1[...] = jnp.full_like(m1, -jnp.inf)
        m2[...] = jnp.full_like(m2, -jnp.inf)

    x1 = x1_ref[0]                                    # (C, T)
    x2 = x2_ref[0]                                    # (C, T)
    s1[...] += jnp.sum(x1, axis=1, keepdims=True)     # (C, 1)
    s2[...] += jnp.sum(x2, axis=1, keepdims=True)
    m1[...] = jnp.maximum(m1[...], jnp.max(x1, axis=1, keepdims=True))
    m2[...] = jnp.maximum(m2[...], jnp.max(x2, axis=1, keepdims=True))

    @pl.when(t == pl.num_programs(1) - 1)
    def _finalize():
        y_ref[0, 0:C, :]         = s1[...] * inv_hw   # avg(x1)
        y_ref[0, C:2 * C, :]     = s2[...] * inv_hw   # avg(x2)
        y_ref[0, 2 * C:3 * C, :] = m1[...]            # max(x1)
        y_ref[0, 3 * C:4 * C, :] = m2[...]            # max(x2)


# ---------------------------------------------------------------------------
# Phase 2: channel MLP, batched over B (lane-dense matmuls, weights loaded once).
# ---------------------------------------------------------------------------
def _mlp_kernel(y_ref, w1t_ref, b1_ref, w2t_ref, b2_ref, cw_ref):
    h = jnp.dot(y_ref[...], w1t_ref[...],
                preferred_element_type=jnp.float32) + b1_ref[...]
    h = jnp.maximum(h, 0.0)
    z = jnp.dot(h, w2t_ref[...],
                preferred_element_type=jnp.float32) + b2_ref[...]
    cw_ref[...] = jax.nn.sigmoid(z)


def _pick_hw_tile(hw):
    """Largest lane-friendly tile (<=2048, multiple of 128) that divides HW."""
    for t in (2048, 1024, 512, 256, 128):
        if hw % t == 0:
            return t
    return hw   # odd spatial size: fall back to a single full-extent block


def channel_weights(x1, x2, params):
    """ChannelWeights forward.

    x1, x2: (B, C, H, W) float32.
    Returns channel_weights of shape (2, B, C, 1, 1), matching PyTorch.
    """
    w1, b1, w2, b2 = params          # PyTorch layouts: w (out, in), b (out,)
    B, C, H, W = x1.shape
    HW = H * W
    x1f = x1.reshape(B, C, HW)
    x2f = x2.reshape(B, C, HW)

    T = _pick_hw_tile(HW)
    NT = HW // T

    # ---- pooled stats: (B, 4C, 1) ----
    y = pl.pallas_call(
        functools.partial(_pool_kernel, dim=C, inv_hw=1.0 / HW),
        out_shape=jax.ShapeDtypeStruct((B, 4 * C, 1), jnp.float32),
        grid_spec=pltpu.PrefetchScalarGridSpec(
            num_scalar_prefetch=0,
            grid=(B, NT),
            in_specs=[pl.BlockSpec((1, C, T), lambda b, t: (b, 0, t)),
                      pl.BlockSpec((1, C, T), lambda b, t: (b, 0, t))],
            out_specs=pl.BlockSpec((1, 4 * C, 1), lambda b, t: (b, 0, 0)),
            scratch_shapes=[pltpu.VMEM((C, 1), jnp.float32),
                            pltpu.VMEM((C, 1), jnp.float32),
                            pltpu.VMEM((C, 1), jnp.float32),
                            pltpu.VMEM((C, 1), jnp.float32)],
        ),
        compiler_params=pltpu.CompilerParams(
            dimension_semantics=("parallel", "arbitrary")),
    )(x1f, x2f)

    y = y[:, :, 0]                                    # (B, 4C)

    # ---- batched MLP: (B, 4C) -> (B, 2C) ----
    cw = pl.pallas_call(
        _mlp_kernel,
        out_shape=jax.ShapeDtypeStruct((B, 2 * C), jnp.float32),
    )(y, w1.T, b1.reshape(1, -1), w2.T, b2.reshape(1, -1))

    # (B, 2C) -> (B, 2, C, 1, 1) -> (2, B, C, 1, 1)
    return jnp.transpose(cw.reshape(B, 2, C, 1, 1), (1, 0, 2, 3, 4))


# ---------------------------------------------------------------------------
# Plain-JAX reference mirroring the PyTorch forward (for validation).
# ---------------------------------------------------------------------------
def channel_weights_ref(x1, x2, params):
    w1, b1, w2, b2 = params
    B, C, H, W = x1.shape
    x = jnp.concatenate([x1, x2], axis=1)             # (B, 2C, H, W)
    avg = jnp.mean(x, axis=(2, 3))                    # (B, 2C)
    mx = jnp.max(x, axis=(2, 3))                      # (B, 2C)
    y = jnp.concatenate([avg, mx], axis=1)            # (B, 4C)
    h = jax.nn.relu(y @ w1.T + b1)
    cw = jax.nn.sigmoid(h @ w2.T + b2)                # (B, 2C)
    return jnp.transpose(cw.reshape(B, 2, C, 1, 1), (1, 0, 2, 3, 4))


def init_params(key, dim):
    """Deterministic synthetic weights in PyTorch Linear layout (out, in)."""
    C = dim
    ks = jax.random.split(key, 4)
    w1 = 0.05 * jax.random.normal(ks[0], (4 * C, 4 * C), jnp.float32)  # Linear(4C -> 4C)
    b1 = 0.01 * jax.random.normal(ks[1], (4 * C,), jnp.float32)
    w2 = 0.05 * jax.random.normal(ks[2], (2 * C, 4 * C), jnp.float32)  # Linear(4C -> 2C)
    b2 = 0.01 * jax.random.normal(ks[3], (2 * C,), jnp.float32)
    return (w1, b1, w2, b2)


if __name__ == "__main__":
    B, C, H, W = 2, 4, 16, 16
    key = jax.random.PRNGKey(0)
    k1, k2, kp = jax.random.split(key, 3)
    x1 = jax.random.normal(k1, (B, C, H, W), jnp.float32)
    x2 = jax.random.normal(k2, (B, C, H, W), jnp.float32)
    params = init_params(kp, C)

    cw = channel_weights(x1, x2, params)
    jax.block_until_ready(cw)

    ref = channel_weights_ref(x1, x2, params)
    assert cw.shape == (2, B, C, 1, 1)
    assert jnp.allclose(cw, ref, atol=1e-5, rtol=1e-5)

    print("KERNEL_OK")
</pallas_src>

<mosaic_0001>
module attributes {stable_mosaic.version = 11 : i64} {
  func.func @_pool_kernel(%arg0: i32, %arg1: i32, %arg2: memref<1x4x256xf32, #tpu.memory_space<vmem>>, %arg3: memref<1x4x256xf32, #tpu.memory_space<vmem>>, %arg4: memref<1x16x1xf32, #tpu.memory_space<vmem>>, %arg5: memref<4x1xf32, #tpu.memory_space<vmem>>, %arg6: memref<4x1xf32, #tpu.memory_space<vmem>>, %arg7: memref<4x1xf32, #tpu.memory_space<vmem>>, %arg8: memref<4x1xf32, #tpu.memory_space<vmem>>) attributes {dimension_semantics = [#tpu.dimension_semantics<parallel>, #tpu.dimension_semantics<arbitrary>], iteration_bounds = array<i64: 2, 1>, scalar_prefetch = 0 : i64, scratch_operands = 4 : i64, tpu.core_type = #tpu.core_type<tc>, window_params = [{transform_indices = @transform_0, window_bounds = array<i64: 1, 4, 256>}, {transform_indices = @transform_1, window_bounds = array<i64: 1, 4, 256>}, {transform_indices = @transform_2, window_bounds = array<i64: 1, 16, 1>}]} {
    %c0_i32 = arith.constant 0 : i32
    %0 = arith.cmpi eq, %arg1, %c0_i32 : i32
    %1 = arith.extui %0 : i1 to i32
    %c0_i32_0 = arith.constant 0 : i32
    %2 = arith.cmpi ne, %1, %c0_i32_0 : i32
    scf.if %2 {
      %cst_27 = arith.constant 0.000000e+00 : f32
      %30 = vector.broadcast %cst_27 : f32 to vector<4x1xf32>
      %c0_28 = arith.constant 0 : index
      %c0_29 = arith.constant 0 : index
      %31 = vector.load %arg5[%c0_28, %c0_29] : memref<4x1xf32, #tpu.memory_space<vmem>>, vector<4x1xf32>
      tpu.vector_store %arg5[%c0_28, %c0_29], %30 {strides = array<i32>} : memref<4x1xf32, #tpu.memory_space<vmem>>, vector<4x1xf32>,
      %cst_30 = arith.constant 0.000000e+00 : f32
      %32 = vector.broadcast %cst_30 : f32 to vector<4x1xf32>
      %c0_31 = arith.constant 0 : index
      %c0_32 = arith.constant 0 : index
      %33 = vector.load %arg6[%c0_31, %c0_32] : memref<4x1xf32, #tpu.memory_space<vmem>>, vector<4x1xf32>
      tpu.vector_store %arg6[%c0_31, %c0_32], %32 {strides = array<i32>} : memref<4x1xf32, #tpu.memory_space<vmem>>, vector<4x1xf32>,
      %cst_33 = arith.constant 0xFF800000 : f32
      %34 = vector.broadcast %cst_33 : f32 to vector<4x1xf32>
      %c0_34 = arith.constant 0 : index
      %c0_35 = arith.constant 0 : index
      %35 = vector.load %arg7[%c0_34, %c0_35] : memref<4x1xf32, #tpu.memory_space<vmem>>, vector<4x1xf32>
      tpu.vector_store %arg7[%c0_34, %c0_35], %34 {strides = array<i32>} : memref<4x1xf32, #tpu.memory_space<vmem>>, vector<4x1xf32>,
      %cst_36 = arith.constant 0xFF800000 : f32
      %36 = vector.broadcast %cst_36 : f32 to vector<4x1xf32>
      %c0_37 = arith.constant 0 : index
      %c0_38 = arith.constant 0 : index
      %37 = vector.load %arg8[%c0_37, %c0_38] : memref<4x1xf32, #tpu.memory_space<vmem>>, vector<4x1xf32>
      tpu.vector_store %arg8[%c0_37, %c0_38], %36 {strides = array<i32>} : memref<4x1xf32, #tpu.memory_space<vmem>>, vector<4x1xf32>,
    } else {
    }
    %c0 = arith.constant 0 : index
    %c0_1 = arith.constant 0 : index
    %c0_2 = arith.constant 0 : index
    %3 = vector.load %arg2[%c0, %c0_1, %c0_2] : memref<1x4x256xf32, #tpu.memory_space<vmem>>, vector<1x4x256xf32>
    %4 = vector.shape_cast %3 : vector<1x4x256xf32> to vector<4x256xf32>
    %c0_3 = arith.constant 0 : index
    %c0_4 = arith.constant 0 : index
    %c0_5 = arith.constant 0 : index
    %5 = vector.load %arg3[%c0_3, %c0_4, %c0_5] : memref<1x4x256xf32, #tpu.memory_space<vmem>>, vector<1x4x256xf32>
    %6 = vector.shape_cast %5 : vector<1x4x256xf32> to vector<4x256xf32>
    %c0_6 = arith.constant 0 : index
    %c0_7 = arith.constant 0 : index
    %7 = vector.load %arg5[%c0_6, %c0_7] : memref<4x1xf32, #tpu.memory_space<vmem>>, vector<4x1xf32>
    %cst = arith.constant dense<0.000000e+00> : vector<4xf32>
    %8 = vector.multi_reduction <add>, %4, %cst [1] : vector<4x256xf32> to vector<4xf32>
    %9 = vector.shape_cast %8 : vector<4xf32> to vector<4x1xf32>
    %10 = arith.addf %7, %9 : vector<4x1xf32>
    %c0_8 = arith.constant 0 : index
    %c0_9 = arith.constant 0 : index
    %11 = vector.load %arg5[%c0_8, %c0_9] : memref<4x1xf32, #tpu.memory_space<vmem>>, vector<4x1xf32>
    tpu.vector_store %arg5[%c0_8, %c0_9], %10 {strides = array<i32>} : memref<4x1xf32, #tpu.memory_space<vmem>>, vector<4x1xf32>,
    %c0_10 = arith.constant 0 : index
    %c0_11 = arith.constant 0 : index
    %12 = vector.load %arg6[%c0_10, %c0_11] : memref<4x1xf32, #tpu.memory_space<vmem>>, vector<4x1xf32>
    %cst_12 = arith.constant dense<0.000000e+00> : vector<4xf32>
    %13 = vector.multi_reduction <add>, %6, %cst_12 [1] : vector<4x256xf32> to vector<4xf32>
    %14 = vector.shape_cast %13 : vector<4xf32> to vector<4x1xf32>
    %15 = arith.addf %12, %14 : vector<4x1xf32>
    %c0_13 = arith.constant 0 : index
    %c0_14 = arith.constant 0 : index
    %16 = vector.load %arg6[%c0_13, %c0_14] : memref<4x1xf32, #tpu.memory_space<vmem>>, vector<4x1xf32>
    tpu.vector_store %arg6[%c0_13, %c0_14], %15 {strides = array<i32>} : memref<4x1xf32, #tpu.memory_space<vmem>>, vector<4x1xf32>,
    %c0_15 = arith.constant 0 : index
    %c0_16 = arith.constant 0 : index
    %17 = vector.load %arg7[%c0_15, %c0_16] : memref<4x1xf32, #tpu.memory_space<vmem>>, vector<4x1xf32>
    %cst_17 = arith.constant dense<0xFF800000> : vector<4xf32>
    %18 = vector.multi_reduction <maximumf>, %4, %cst_17 [1] : vector<4x256xf32> to vector<4xf32>
    %19 = vector.shape_cast %18 : vector<4xf32> to vector<4x1xf32>
    %20 = arith.maximumf %17, %19 : vector<4x1xf32>
    %c0_18 = arith.constant 0 : index
    %c0_19 = arith.constant 0 : index
    %21 = vector.load %arg7[%c0_18, %c0_19] : memref<4x1xf32, #tpu.memory_space<vmem>>, vector<4x1xf32>
    tpu.vector_store %arg7[%c0_18, %c0_19], %20 {strides = array<i32>} : memref<4x1xf32, #tpu.memory_space<vmem>>, vector<4x1xf32>,
    %c0_20 = arith.constant 0 : index
    %c0_21 = arith.constant 0 : index
    %22 = vector.load %arg8[%c0_20, %c0_21] : memref<4x1xf32, #tpu.memory_space<vmem>>, vector<4x1xf32>
    %cst_22 = arith.constant dense<0xFF800000> : vector<4xf32>
    %23 = vector.multi_reduction <maximumf>, %6, %cst_22 [1] : vector<4x256xf32> to vector<4xf32>
    %24 = vector.shape_cast %23 : vector<4xf32> to vector<4x1xf32>
    %25 = arith.maximumf %22, %24 : vector<4x1xf32>
    %c0_23 = arith.constant 0 : index
    %c0_24 = arith.constant 0 : index
    %26 = vector.load %arg8[%c0_23, %c0_24] : memref<4x1xf32, #tpu.memory_space<vmem>>, vector<4x1xf32>
    tpu.vector_store %arg8[%c0_23, %c0_24], %25 {strides = array<i32>} : memref<4x1xf32, #tpu.memory_space<vmem>>, vector<4x1xf32>,
    %c0_i32_25 = arith.constant 0 : i32
    %27 = arith.cmpi eq, %arg1, %c0_i32_25 : i32
    %28 = arith.extui %27 : i1 to i32
    %c0_i32_26 = arith.constant 0 : i32
    %29 = arith.cmpi ne, %28, %c0_i32_26 : i32
    scf.if %29 {
      %c0_27 = arith.constant 0 : index
      %c0_28 = arith.constant 0 : index
      %30 = vector.load %arg5[%c0_27, %c0_28] : memref<4x1xf32, #tpu.memory_space<vmem>>, vector<4x1xf32>
      %cst_29 = arith.constant 3.906250e-03 : f32
      %31 = vector.broadcast %cst_29 : f32 to vector<4x1xf32>
      %32 = arith.mulf %30, %31 : vector<4x1xf32>
      %c0_30 = arith.constant 0 : index
      %c0_31 = arith.constant 0 : index
      %c0_32 = arith.constant 0 : index
      %33 = vector.load %arg4[%c0_30, %c0_31, %c0_32] : memref<1x16x1xf32, #tpu.memory_space<vmem>>, vector<1x4x1xf32>
      %34 = vector.shape_cast %33 : vector<1x4x1xf32> to vector<4x1xf32>
      %35 = vector.shape_cast %32 : vector<4x1xf32> to vector<1x4x1xf32>
      tpu.vector_store %arg4[%c0_30, %c0_31, %c0_32], %35 {strides = array<i32>} : memref<1x16x1xf32, #tpu.memory_space<vmem>>, vector<1x4x1xf32>,
      %c0_33 = arith.constant 0 : index
      %c0_34 = arith.constant 0 : index
      %36 = vector.load %arg6[%c0_33, %c0_34] : memref<4x1xf32, #tpu.memory_space<vmem>>, vector<4x1xf32>
      %cst_35 = arith.constant 3.906250e-03 : f32
      %37 = vector.broadcast %cst_35 : f32 to vector<4x1xf32>
      %38 = arith.mulf %36, %37 : vector<4x1xf32>
      %c0_36 = arith.constant 0 : index
      %c4 = arith.constant 4 : index
      %c0_37 = arith.constant 0 : index
      %39 = vector.load %arg4[%c0_36, %c4, %c0_37] : memref<1x16x1xf32, #tpu.memory_space<vmem>>, vector<1x4x1xf32>
      %40 = vector.shape_cast %39 : vector<1x4x1xf32> to vector<4x1xf32>
      %41 = vector.shape_cast %38 : vector<4x1xf32> to vector<1x4x1xf32>
      tpu.vector_store %arg4[%c0_36, %c4, %c0_37], %41 {strides = array<i32>} : memref<1x16x1xf32, #tpu.memory_space<vmem>>, vector<1x4x1xf32>,
      %c0_38 = arith.constant 0 : index
      %c0_39 = arith.constant 0 : index
      %42 = vector.load %arg7[%c0_38, %c0_39] : memref<4x1xf32, #tpu.memory_space<vmem>>, vector<4x1xf32>
      %c0_40 = arith.constant 0 : index
      %c8 = arith.constant 8 : index
      %c0_41 = arith.constant 0 : index
      %43 = vector.load %arg4[%c0_40, %c8, %c0_41] : memref<1x16x1xf32, #tpu.memory_space<vmem>>, vector<1x4x1xf32>
      %44 = vector.shape_cast %43 : vector<1x4x1xf32> to vector<4x1xf32>
      %45 = vector.shape_cast %42 : vector<4x1xf32> to vector<1x4x1xf32>
      tpu.vector_store %arg4[%c0_40, %c8, %c0_41], %45 {strides = array<i32>} : memref<1x16x1xf32, #tpu.memory_space<vmem>>, vector<1x4x1xf32>,
      %c0_42 = arith.constant 0 : index
      %c0_43 = arith.constant 0 : index
      %46 = vector.load %arg8[%c0_42, %c0_43] : memref<4x1xf32, #tpu.memory_space<vmem>>, vector<4x1xf32>
      %c0_44 = arith.constant 0 : index
      %c12 = arith.constant 12 : index
      %c0_45 = arith.constant 0 : index
      %47 = vector.load %arg4[%c0_44, %c12, %c0_45] : memref<1x16x1xf32, #tpu.memory_space<vmem>>, vector<1x4x1xf32>
      %48 = vector.shape_cast %47 : vector<1x4x1xf32> to vector<4x1xf32>
      %49 = vector.shape_cast %46 : vector<4x1xf32> to vector<1x4x1xf32>
      tpu.vector_store %arg4[%c0_44, %c12, %c0_45], %49 {strides = array<i32>} : memref<1x16x1xf32, #tpu.memory_space<vmem>>, vector<1x4x1xf32>,
    } else {
    }
    return
  }
  func.func @transform_0(%arg0: i32, %arg1: i32) -> (i32, i32, i32) {
    %c0_i32 = arith.constant 0 : i32
    %c0_i32_0 = arith.constant 0 : i32
    return %arg0, %c0_i32, %arg1 : i32, i32, i32
  }
  func.func @transform_1(%arg0: i32, %arg1: i32) -> (i32, i32, i32) {
    %c0_i32 = arith.constant 0 : i32
    %c0_i32_0 = arith.constant 0 : i32
    return %arg0, %c0_i32, %arg1 : i32, i32, i32
  }
  func.func @transform_2(%arg0: i32, %arg1: i32) -> (i32, i32, i32) {
    %c0_i32 = arith.constant 0 : i32
    %c0_i32_0 = arith.constant 0 : i32
    %c0_i32_1 = arith.constant 0 : i32
    return %arg0, %c0_i32, %c0_i32_0 : i32, i32, i32
  }
}

</mosaic_0001>

<llo_original>
// kernel: tpu_custom_call.1
$region0: #{tpu_custom_call.1}
  #allocation0 [shape = 'u32[]', space=smem, size = 0x4, offset = 0x4, fixed_abs, tag = 'smem constant byte address 0x4 - core index']
  #allocation1 [shape = 'u32[144,128]{1,0:T(1,128)}', space=vmem, size = 0x12000, scoped, tag = 'internal scratch']
  #allocation2 [shape = 'f32[4,1]{1,0:T(4,128)}', space=vmem, size = 0x800, scoped, tag = 'scratch operand']
  #allocation3 [shape = 'f32[4,1]{1,0:T(4,128)}', space=vmem, size = 0x800, scoped, tag = 'scratch operand']
  #allocation4 [shape = 'f32[4,1]{1,0:T(4,128)}', space=vmem, size = 0x800, scoped, tag = 'scratch operand']
  #allocation5 [shape = 'f32[4,1]{1,0:T(4,128)}', space=vmem, size = 0x800, scoped, tag = 'scratch operand']
  %s0 = inlined_call_operand.hbm [shape: f32[2,4,256], index: 0, kind: input, shape index: {}]
  %s1 = inlined_call_operand.hbm [shape: f32[2,4,256], index: 1, kind: input, shape index: {}]
  %s2 = inlined_call_operand.vmem [shape: f32[2,16,1], index: 2, kind: output, shape index: {}]
  %s3 = sld [smem:[#allocation0]]
  $region57: #{tpu_custom_call.1} parent=0
    _
  %s5 = ssub.s32 1, %s3
  %s6 = scalar_select 0, %s5, %s3
  $region1: #{tpu_custom_call.1} parent=0
    #allocation6 [shape = 'u8[8192]{0}', space=vmem, size = 0x2000, scoped, tag = 'input window, operand 0']
    #allocation7 [shape = 's32[2]{0}', space=sflag, size = 0x8, scoped, tag = 'scoped memory for tpu_custom_call.1']
    #allocation8 [shape = 'u8[8192]{0}', space=vmem, size = 0x2000, scoped, tag = 'input window, operand 1']
    #allocation9 [shape = 's32[2]{0}', space=sflag, size = 0x8, scoped, tag = 'scoped memory for tpu_custom_call.1']
    %7 = vsyncpa [#allocation7], 0
    %s8 = scalar_lea.sflag [#allocation7], 1
    %9 = vsyncpa %s8, 0
    %10 = vsyncpa [#allocation9], 0
    %s11 = scalar_lea.sflag [#allocation9], 1
    %12 = vsyncpa %s11, 0
    loop: start=0, step=1, limit=4
    $region2: #{tpu_custom_call.1} parent=1 // loop_pre_header
      _
    $region3: #{tpu_custom_call.1} parent=1 // loop_header
      %s14 = sphi 0, %s18
      %p15 = scmp.ge.s32.totalorder %s14, 4
      %s21 = sphi 0, %s33
      %s22 = sphi 0, %s29
      %s23 = sphi 0, %s21
      %s24 = sphi 0, %s22
      %s25 = sphi 0, %s23
      %s26 = sphi 0, %s24
      %s38 = sphi 0, %s40
      %s41 = sphi 0, %s38
      %s42 = sphi 0, %s41
      %s58 = sphi 0, %s42
      %s66 = sphi 0, %s68
      %s69 = sphi 0, %s66
      %s70 = sphi 0, %s69
      %s86 = sphi 0, %s70
      %s92 = sphi 0, %s94
      %s95 = sphi 0, %s92
      %s96 = sphi 0, %s95
      %s112 = sphi 0, %s96
    $region4: #{tpu_custom_call.1} parent=1 // loop_header_branch
      %17 = sbr.rel (%p15) target = $region8
    $region5: #{tpu_custom_call.1} parent=1 // loop_body
      %s19 = ssub.s32 %s14, 1
      %s20 = ssub.s32 %s14, 2
      %s27 = sadd.s32 1, %s22
      %p28 = scmp.ge.s32.totalorder %s27, 1
      %s29 = scalar_select %p28, 0, %s27
      %s30 = sadd.s32 1, %s21
      %s31 = scalar_select %p28, %s30, %s21
      %p32 = scmp.ge.s32.totalorder %s31, 2
      %s33 = scalar_select %p32, 0, %s31
      %s34 = ssub.s32 %s21, %s33
      %s35 = ssub.s32 %s22, %s29
      %s36 = sor.u32 %s34, %s35
      %p37 = scmp.eq.s32.totalorder %s36, 0
      %s39 = sadd.s32 %s38, 1
      %s40 = scalar_select %p37, %s38, %s39
      %p43 = pneg %p37
      %p44 = scmp.eq.s32.totalorder %s14, 1
      %p45 = por %p43, %p44
      %p46 = scmp.ne.s32.totalorder %s38, %s41
      %p47 = scmp.eq.s32.totalorder %s14, 0
      %p48 = por %p46, %p47
      %p49 = scmp.ne.s32.totalorder %s38, %s41
      %p50 = scmp.eq.s32.totalorder %s19, 1
      %p51 = por %p49, %p50
      %p52 = scmp.ne.s32.totalorder %s41, %s42
      %p53 = scmp.eq.s32.totalorder %s19, 0
      %p54 = por %p52, %p53
      %p55 = scmp.ne.s32.totalorder %s41, %s42
      %p56 = scmp.eq.s32.totalorder %s20, 1
      %p57 = por %p55, %p56
      %p59 = scmp.ne.s32.totalorder %s42, %s58
      %p60 = scmp.eq.s32.totalorder %s20, 0
      %p61 = por %p59, %p60
      %s62 = ssub.s32 %s21, %s33
      %s63 = ssub.s32 %s22, %s29
      %s64 = sor.u32 %s62, %s63
      %p65 = scmp.eq.s32.totalorder %s64, 0
      %s67 = sadd.s32 %s66, 1
      %s68 = scalar_select %p65, %s66, %s67
      %p71 = pneg %p65
      %p72 = scmp.eq.s32.totalorder %s14, 1
      %p73 = por %p71, %p72
      %p74 = scmp.ne.s32.totalorder %s66, %s69
      %p75 = scmp.eq.s32.totalorder %s14, 0
      %p76 = por %p74, %p75
      %p77 = scmp.ne.s32.totalorder %s66, %s69
      %p78 = scmp.eq.s32.totalorder %s19, 1
      %p79 = por %p77, %p78
      %p80 = scmp.ne.s32.totalorder %s69, %s70
      %p81 = scmp.eq.s32.totalorder %s19, 0
      %p82 = por %p80, %p81
      %p83 = scmp.ne.s32.totalorder %s69, %s70
      %p84 = scmp.eq.s32.totalorder %s20, 1
      %p85 = por %p83, %p84
      %p87 = scmp.ne.s32.totalorder %s70, %s86
      %p88 = scmp.eq.s32.totalorder %s20, 0
      %p89 = por %p87, %p88
      %s90 = ssub.s32 %s21, %s33
      %p91 = scmp.eq.s32.totalorder %s90, 0
      %s93 = sadd.s32 %s92, 1
      %s94 = scalar_select %p91, %s92, %s93
      %p97 = pneg %p91
      %p98 = scmp.eq.s32.totalorder %s14, 1
      %p99 = por %p97, %p98
      %p100 = scmp.ne.s32.totalorder %s92, %s95
      %p101 = scmp.eq.s32.totalorder %s14, 0
      %p102 = por %p100, %p101
      %p103 = scmp.ne.s32.totalorder %s92, %s95
      %p104 = scmp.eq.s32.totalorder %s19, 1
      %p105 = por %p103, %p104
      %p106 = scmp.ne.s32.totalorder %s95, %s96
      %p107 = scmp.eq.s32.totalorder %s19, 0
      %p108 = por %p106, %p107
      %p109 = scmp.ne.s32.totalorder %s95, %s96
      %p110 = scmp.eq.s32.totalorder %s20, 1
      %p111 = por %p109, %p110
      %p113 = scmp.ne.s32.totalorder %s96, %s112
      %p114 = scmp.eq.s32.totalorder %s20, 0
      %p115 = por %p113, %p114
      %p116 = scmp.le.s32.totalorder 1, %s14
      %p117 = scmp.lt.s32.totalorder %s14, 3
      %p118 = pnand %p116, %p117
      %p119 = pneg %p118
      // Predicated region
      $region9: #{tpu_custom_call.1} parent=5 // pred_check
        _
      $region10: #{tpu_custom_call.1} parent=5 // pred_check_branch
        %121 = sbr.rel (%p118) target = $region12
      $region11: #{tpu_custom_call.1} parent=5 // pred_region
        %s122 = ssub.s32 %s14, 1
      $region12: #{tpu_custom_call.1} parent=5 // pred_fallthru
        _
      %p123 = scmp.lt.s32.totalorder %s14, 2
      // Predicated region
      $region13: #{tpu_custom_call.1} parent=5 // pred_check
        %p124 = pneg %p123
      $region14: #{tpu_custom_call.1} parent=5 // pred_check_branch
        %126 = sbr.rel (%p124) target = $region16
      $region15: #{tpu_custom_call.1} parent=5 // pred_region
        // Predicated region
        $region17: #{tpu_custom_call.1} parent=15 // pred_check
          %p127 = pneg %p48
        $region18: #{tpu_custom_call.1} parent=15 // pred_check_branch
          %129 = sbr.rel (%p127) target = $region20
        $region19: #{tpu_custom_call.1} parent=15 // pred_region
          %s130 = sand.u32 %s38, 1
          %s131 = scalar_lea.sflag [#allocation7], %s130
          %s132 = sand.u32 %s38, 1
          %s133 = smul.addr %s132, 8
          %s134 = scalar_lea.vmem [#allocation6], %s133
          %s135 = smul.u32 2, %s22
          %s137 = ssub.s32 128, 128
          %138 = vsyncadd %s131, %s137
          %s139 = smul.addr %s21, 2
          %s140 = sadd.s32 %s135, %s139
          %s141 = smul.addr %s140, 64
          %s142 = scalar_lea.hbm %s0, %s141
          %s144 = sshll.u32 %s134, 4
          %s145 = int_to_ptr.vmem [resolvable:$true] %s144
          %147 = dma.hbm_to_vmem [thread:$0]  %s142, 128, %s145, %s131
        $region20: #{tpu_custom_call.1} parent=15 // pred_fallthru
          _
        // Predicated region
        $region21: #{tpu_custom_call.1} parent=15 // pred_check
          %p148 = pneg %p76
        $region22: #{tpu_custom_call.1} parent=15 // pred_check_branch
          %150 = sbr.rel (%p148) target = $region24
        $region23: #{tpu_custom_call.1} parent=15 // pred_region
          %s151 = sand.u32 %s66, 1
          %s152 = scalar_lea.sflag [#allocation9], %s151
          %s153 = sand.u32 %s66, 1
          %s154 = smul.addr %s153, 8
          %s155 = scalar_lea.vmem [#allocation8], %s154
          %s156 = smul.u32 2, %s22
          %s158 = ssub.s32 128, 128
          %159 = vsyncadd %s152, %s158
          %s160 = smul.addr %s21, 2
          %s161 = sadd.s32 %s156, %s160
          %s162 = smul.addr %s161, 64
          %s163 = scalar_lea.hbm %s1, %s162
          %s165 = sshll.u32 %s155, 4
          %s166 = int_to_ptr.vmem [resolvable:$true] %s165
          %168 = dma.hbm_to_vmem [thread:$0]  %s163, 128, %s166, %s152
        $region24: #{tpu_custom_call.1} parent=15 // pred_fallthru
          _
      $region16: #{tpu_custom_call.1} parent=5 // pred_fallthru
        _
      %p169 = scmp.le.s32.totalorder 1, %s14
      %p170 = scmp.lt.s32.totalorder %s14, 3
      %p171 = pnand %p169, %p170
      %p172 = pneg %p171
      // Predicated region
      $region25: #{tpu_custom_call.1} parent=5 // pred_check
        _
      $region26: #{tpu_custom_call.1} parent=5 // pred_check_branch
        %174 = sbr.rel (%p171) target = $region28
      $region27: #{tpu_custom_call.1} parent=5 // pred_region
        %s175 = ssub.s32 %s14, 1
        %s176 = sand.u32 %s41, 1
        %s177 = scalar_lea.sflag [#allocation7], %s176
        %s178 = sand.u32 %s41, 1
        %s179 = smul.addr %s178, 8
        %s180 = scalar_lea.vmem [#allocation6], %s179
        // Predicated region
        $region29: #{tpu_custom_call.1} parent=27 // pred_check
          %p181 = pneg %p54
        $region30: #{tpu_custom_call.1} parent=27 // pred_check_branch
          %183 = sbr.rel (%p181) target = $region32
        $region31: #{tpu_custom_call.1} parent=27 // pred_region
          %184 = dma.done %s177, 128
        $region32: #{tpu_custom_call.1} parent=27 // pred_fallthru
          _
        %s185 = sand.u32 %s69, 1
        %s186 = scalar_lea.sflag [#allocation9], %s185
        %s187 = sand.u32 %s69, 1
        %s188 = smul.addr %s187, 8
        %s189 = scalar_lea.vmem [#allocation8], %s188
        // Predicated region
        $region33: #{tpu_custom_call.1} parent=27 // pred_check
          %p190 = pneg %p82
        $region34: #{tpu_custom_call.1} parent=27 // pred_check_branch
          %192 = sbr.rel (%p190) target = $region36
        $region35: #{tpu_custom_call.1} parent=27 // pred_region
          %193 = dma.done %s186, 128
        $region36: #{tpu_custom_call.1} parent=27 // pred_fallthru
          _
        %s194 = sand.u32 %s41, 1
        %s195 = scalar_lea.sflag [#allocation7], %s194
        %s196 = sand.u32 %s41, 1
        %s197 = smul.addr %s196, 8
        %s198 = scalar_lea.vmem [#allocation6], %s197
        %p199 = pneg %p54
        %p200 = pneg %p51
        %s201 = sand.u32 %s69, 1
        %s202 = scalar_lea.sflag [#allocation9], %s201
        %s203 = sand.u32 %s69, 1
        %s204 = smul.addr %s203, 8
        %s205 = scalar_lea.vmem [#allocation8], %s204
        %p206 = pneg %p82
        %p207 = pneg %p79
        %p208 = pneg %p108
        %p209 = pneg %p105
        %p210 = scmp.lt.s32.totalorder %s23, 1
        %s211 = scalar_select %p210, %s23, 1
        %s212 = smul.addr %s211, 2
        %s213 = smul.addr %s212, 8
        %s214 = scalar_lea.vmem %s2, %s213
        %s215 = smul.u32 2, %s24
        %s216 = smul.u32 2, %s24
        %p217 = scmp.lt.s32.totalorder %s23, 1
        %s218 = scalar_select %p217, %s23, 1
        %s219 = smul.addr %s218, 2
        %s220 = smul.addr %s219, 8
        %s221 = scalar_lea.vmem %s2, %s220
        %p222 = scmp.eq.s32.totalorder %s24, 0
        // Predicated region
        $region37: #{tpu_custom_call.1} parent=27 // pred_check
          %p223 = pneg %p222
        $region38: #{tpu_custom_call.1} parent=27 // pred_check_branch
          %225 = sbr.rel (%p223) target = $region40
        $region39: #{tpu_custom_call.1} parent=27 // pred_region
          %vm226 = vcmask 3072
          %227 = vst.msk [vmem:[#allocation2] sm:$0xf] %vm226, 0.0
          %228 = vst.msk [vmem:[#allocation3] sm:$0xf] %vm226, 0.0
          %229 = vst.msk [vmem:[#allocation4] sm:$0xf] %vm226, -inf
          %230 = vst.msk [vmem:[#allocation5] sm:$0xf] %vm226, -inf
        $region40: #{tpu_custom_call.1} parent=27 // pred_fallthru
          _
        %v231 = vld [vmem:[%s180] sm:$0xff]
        %v232 = vld [vmem:[%s189] sm:$0xff]
        %v233 = vld [vmem:[#allocation2] sm:$0xf]
        %v235 = vcombine.high %v231, %v231
        %vm237 = vcmask 1043456
        %v238 = vsel %vm237, %v231, 0.0
        %v239 = vsel %vm237, %v235, 0.0
        %v240 = vadd.f32 %v238, %v239
        %241 = vadd.xlane.f32.xlu0 %v240
        %v242 = vpop.xlane.xlu0 %241
        %v243 = vadd.f32 %v233, %v242
        %vm244 = vcmask 3072
        %245 = vst.msk [vmem:[#allocation2] sm:$0xf] %vm244, %v243
        %v246 = vld [vmem:[#allocation3] sm:$0xf]
        %v248 = vcombine.high %v232, %v232
        %v250 = vsel %vm237, %v232, 0.0
        %v251 = vsel %vm237, %v248, 0.0
        %v252 = vadd.f32 %v250, %v251
        %253 = vadd.xlane.f32.xlu0 %v252
        %v254 = vpop.xlane.xlu0 %253
        %v255 = vadd.f32 %v246, %v254
        %256 = vst.msk [vmem:[#allocation3] sm:$0xf] %vm244, %v255
        %v257 = vld [vmem:[#allocation4] sm:$0xf]
        %v258 = vsel %vm237, %v231, -inf
        %v259 = vsel %vm237, %v235, -inf
        %v260 = vmax.f32 %v258, %v259
        %261 = vmax.xlane.f32.xlu0 %v260
        %v262 = vpop.xlane.xlu0 %261
        %v263 = vmax.f32 %v257, %v262
        %264 = vst.msk [vmem:[#allocation4] sm:$0xf] %vm244, %v263
        %v265 = vld [vmem:[#allocation5] sm:$0xf]
        %v266 = vsel %vm237, %v232, -inf
        %v267 = vsel %vm237, %v248, -inf
        %v268 = vmax.f32 %v266, %v267
        %269 = vmax.xlane.f32.xlu0 %v268
        %v270 = vpop.xlane.xlu0 %269
        %v271 = vmax.f32 %v265, %v270
        %272 = vst.msk [vmem:[#allocation5] sm:$0xf] %vm244, %v271
        // Predicated region
        $region41: #{tpu_custom_call.1} parent=27 // pred_check
          %p273 = pneg %p222
        $region42: #{tpu_custom_call.1} parent=27 // pred_check_branch
          %275 = sbr.rel (%p273) target = $region44
        $region43: #{tpu_custom_call.1} parent=27 // pred_region
          %v276 = vld [vmem:[#allocation2] sm:$0xf]
          %v277 = vmul.f32 %v276, 0.00390625
          %278 = vst.msk [vmem:[%s221] sm:$0xf] %vm244, %v277
          %v279 = vld [vmem:[#allocation3] sm:$0xf]
          %v280 = vmul.f32 %v279, 0.00390625
          %281 = vst.msk [vmem:[%s221 + $0x4] sm:$0xf] %vm244, %v280
          %v282 = vld [vmem:[#allocation4] sm:$0xf]
          %283 = vst.msk [vmem:[%s221 + $0x8] sm:$0xf] %vm244, %v282
          %v284 = vld [vmem:[#allocation5] sm:$0xf]
          %285 = vst.msk [vmem:[%s221 + $0xc] sm:$0xf] %vm244, %v284
        $region44: #{tpu_custom_call.1} parent=27 // pred_fallthru
          _
        %p286 = scmp.lt.s32.totalorder %s23, 1
        %s287 = scalar_select %p286, %s23, 1
        %s288 = smul.addr %s287, 2
        %s289 = smul.addr %s288, 8
        %s290 = scalar_lea.vmem %s2, %s289
        // Predicated region
        $region45: #{tpu_custom_call.1} parent=27 // pred_check
          %p291 = pneg %p105
        $region46: #{tpu_custom_call.1} parent=27 // pred_check_branch
          %293 = sbr.rel (%p291) target = $region48
        $region47: #{tpu_custom_call.1} parent=27 // pred_region
          _
        $region48: #{tpu_custom_call.1} parent=27 // pred_fallthru
          _
      $region28: #{tpu_custom_call.1} parent=5 // pred_fallthru
        _
      %p294 = scmp.le.s32.totalorder 2, %s14
      // Predicated region
      $region49: #{tpu_custom_call.1} parent=5 // pred_check
        %p295 = pneg %p294
      $region50: #{tpu_custom_call.1} parent=5 // pred_check_branch
        %297 = sbr.rel (%p295) target = $region52
      $region51: #{tpu_custom_call.1} parent=5 // pred_region
        %s298 = ssub.s32 %s14, 2
        // Predicated region
        $region53: #{tpu_custom_call.1} parent=51 // pred_check
          %p299 = pneg %p111
        $region54: #{tpu_custom_call.1} parent=51 // pred_check_branch
          %301 = sbr.rel (%p299) target = $region56
        $region55: #{tpu_custom_call.1} parent=51 // pred_region
          %p302 = scmp.lt.s32.totalorder %s25, 1
          %s303 = scalar_select %p302, %s25, 1
          %s304 = smul.addr %s303, 2
          %s305 = smul.addr %s304, 8
          %s306 = scalar_lea.vmem %s2, %s305
        $region56: #{tpu_custom_call.1} parent=51 // pred_fallthru
          _
      $region52: #{tpu_custom_call.1} parent=5 // pred_fallthru
        _
    $region6: #{tpu_custom_call.1} parent=1 // loop_footer
      %s18 = sadd.s32 1, %s14
    $region7: #{tpu_custom_call.1} parent=1 // loop_footer_branch
      %13 = sbr.rel target = $region3
    $region8: #{tpu_custom_call.1} parent=1 // loop_exit
      _
    %307 = vsyncpa [#allocation7], 1
    %s308 = scalar_lea.sflag [#allocation7], 1
    %309 = vsyncpa %s308, 1
    %310 = vsyncpa [#allocation9], 1
    %s311 = scalar_lea.sflag [#allocation9], 1
    %312 = vsyncpa %s311, 1

</llo_original>
